<compile_context>
chip_gen: v6e
topology: v6e:2x2x1
jax: 0.10.0
libtpu: 0.0.40
codegen_flags: <defaults>
</compile_context>

<pallas_src>
import jax
import jax.numpy as jnp
from jax import lax
from jax.experimental import pallas as pl
from jax.experimental.pallas import tpu as pltpu


def linear_hsig_kernel(x_ref, w_ref, b_ref, o_ref):
    # x: (tb, K), w: (N, K), b: (1, N)
    x = x_ref[...]
    w = w_ref[...]
    b = b_ref[...]
    # MXU matmul contracting K (dim 1) of both operands — no transpose needed.
    y = lax.dot_general(
        x, w,
        dimension_numbers=(((1,), (1,)), ((), ())),
        preferred_element_type=jnp.float32,
    )
    y = jnp.clip(y + b + 3.0, 0.0, 6.0) * (1.0 / 6.0)
    # o_ref is either the plain (B, N) layout (small path) or the lane-dense
    # (tb//pack, pack*N) layout (batched path); row-major reshape matches both.
    o_ref[...] = y.reshape(o_ref.shape).astype(o_ref.dtype)


def _cost(B, K, N):
    return pl.CostEstimate(
        flops=2 * B * K * N,
        transcendentals=0,
        bytes_accessed=(B * K + B * N + N * K + N) * 4,
    )


def _linear_hsig_small(x, w, b2):
    """B small/medium: single invocation, whole arrays resident in VMEM."""
    B, K = x.shape
    N = w.shape[0]
    return pl.pallas_call(
        linear_hsig_kernel,
        out_shape=jax.ShapeDtypeStruct((B, N), x.dtype),
        in_specs=[
            pl.BlockSpec(memory_space=pltpu.MemorySpace.VMEM),
            pl.BlockSpec(memory_space=pltpu.MemorySpace.VMEM),
            pl.BlockSpec(memory_space=pltpu.MemorySpace.VMEM),
        ],
        out_specs=pl.BlockSpec(memory_space=pltpu.MemorySpace.VMEM),
        cost_estimate=_cost(B, K, N),
    )(x, w, b2)


def _pick_tb(B):
    # Largest tile in {1024, 2048} that still yields >= 2 grid steps, so
    # dimension_semantics=("parallel",) actually shards the batch axis across
    # v7x's two TensorCores; on v5e/v6e bigger tiles just amortize per-step
    # overhead (grid is a serial loop there).
    return 2048 if B > 2048 else 1024


def _linear_hsig_batched(x, w, b2, tb):
    """B large: tile batch axis over the grid; W/b stay resident in VMEM."""
    B, K = x.shape
    N = w.shape[0]
    # Pack `pack` output rows of width N into one lane-dense row of width
    # pack*N == 128 so output stores are unmasked full-lane vsts.
    pack = 128 // N if (N <= 128 and 128 % N == 0) else 1
    out_rows = pl.cdiv(B, pack)
    n_steps = pl.cdiv(B, tb)

    out2d = pl.pallas_call(
        linear_hsig_kernel,
        out_shape=jax.ShapeDtypeStruct((out_rows, pack * N), x.dtype),
        grid=(n_steps,),
        in_specs=[
            # TODO(synk): add pipeline_mode=pl.Buffered(3) on x only if a
            # profile still shows exposed input DMA after the larger tile.
            pl.BlockSpec((tb, K), lambda i: (i, 0)),
            pl.BlockSpec((N, K), lambda i: (0, 0)),   # weights resident
            pl.BlockSpec((1, N), lambda i: (0, 0)),   # bias resident
        ],
        out_specs=pl.BlockSpec((tb // pack, pack * N), lambda i: (i, 0)),
        compiler_params=pltpu.CompilerParams(
            dimension_semantics=("parallel",)),       # shard steps across TCs
        cost_estimate=_cost(B, K, N),
    )(x, w, b2)
    # Undo the lane-dense packing; rows >= B (from ceil-to-`pack` and partial
    # final grid block) contain don't-care data and are sliced off.
    return out2d.reshape(out_rows * pack, N)[:B]


SMALL_B_CUTOFF = 1024


def linear_hsig(x, w, b):
    B, _ = x.shape
    N = w.shape[0]
    b2 = b.reshape(1, N)
    if B <= SMALL_B_CUTOFF:
        return _linear_hsig_small(x, w, b2)
    return _linear_hsig_batched(x, w, b2, _pick_tb(B))


if __name__ == "__main__":
    key = jax.random.PRNGKey(0)
    kx, kw, kb, kbig, kodd = jax.random.split(key, 5)

    in_features, out_features = 64, 32
    bound = 1.0 / jnp.sqrt(in_features)
    w = jax.random.uniform(kw, (out_features, in_features),
                           minval=-bound, maxval=bound, dtype=jnp.float32)
    b = jax.random.uniform(kb, (out_features,),
                           minval=-bound, maxval=bound, dtype=jnp.float32)

    def reference(xx):
        return jnp.clip(xx @ w.T + b + 3.0, 0.0, 6.0) / 6.0

    # Module-spec shape: x1 = (1, 64)  -> small / whole-in-VMEM path.
    x1 = jax.random.normal(kx, (1, in_features), dtype=jnp.float32)
    out = jax.block_until_ready(linear_hsig(x1, w, b))
    assert out.shape == (1, out_features)
    assert jnp.allclose(out, reference(x1), atol=1e-5, rtol=1e-5)

    # Batched (grid-tiled, lane-dense output) path, B a multiple of the tile.
    xb = jax.random.normal(kbig, (4096, in_features), dtype=jnp.float32)
    outb = jax.block_until_ready(linear_hsig(xb, w, b))
    assert outb.shape == (4096, out_features)
    assert jnp.allclose(outb, reference(xb), atol=1e-5, rtol=1e-5)

    # Batched path with ragged B (partial final block, B % 4 != 0).
    xo = jax.random.normal(kodd, (2503, in_features), dtype=jnp.float32)
    outo = jax.block_until_ready(linear_hsig(xo, w, b))
    assert outo.shape == (2503, out_features)
    assert jnp.allclose(outo, reference(xo), atol=1e-5, rtol=1e-5)

    print("KERNEL_OK")
</pallas_src>

<mosaic_0001>
module attributes {stable_mosaic.version = 11 : i64} {
  func.func @linear_hsig_kernel(%arg0: memref<1x64xf32, #tpu.memory_space<vmem>>, %arg1: memref<32x64xf32, #tpu.memory_space<vmem>>, %arg2: memref<1x32xf32, #tpu.memory_space<vmem>>, %arg3: memref<1x32xf32, #tpu.memory_space<vmem>>) attributes {dimension_semantics = [], scalar_prefetch = 0 : i64, scratch_operands = 0 : i64, tpu.core_type = #tpu.core_type<tc>} {
    %c0 = arith.constant 0 : index
    %c0_0 = arith.constant 0 : index
    %0 = vector.load %arg0[%c0, %c0_0] : memref<1x64xf32, #tpu.memory_space<vmem>>, vector<1x64xf32>
    %c0_1 = arith.constant 0 : index
    %c0_2 = arith.constant 0 : index
    %1 = vector.load %arg1[%c0_1, %c0_2] : memref<32x64xf32, #tpu.memory_space<vmem>>, vector<32x64xf32>
    %c0_3 = arith.constant 0 : index
    %c0_4 = arith.constant 0 : index
    %2 = vector.load %arg2[%c0_3, %c0_4] : memref<1x32xf32, #tpu.memory_space<vmem>>, vector<1x32xf32>
    %cst = arith.constant dense<0.000000e+00> : vector<1x32xf32>
    %3 = tpu.matmul %0, %1, %cst {dimension_numbers = #tpu.dot_dimension_numbers<[1], [1], [0], [0], [0, 0, 1, 0], [], []>} : vector<1x64xf32>, vector<32x64xf32>, vector<1x32xf32> -> vector<1x32xf32>
    %4 = arith.addf %3, %2 : vector<1x32xf32>
    %cst_5 = arith.constant 3.000000e+00 : f32
    %5 = vector.broadcast %cst_5 : f32 to vector<1x32xf32>
    %6 = arith.addf %4, %5 : vector<1x32xf32>
    %cst_6 = arith.constant 0.000000e+00 : f32
    %cst_7 = arith.constant 6.000000e+00 : f32
    %7 = vector.broadcast %cst_6 : f32 to vector<1x32xf32>
    %8 = arith.maximumf %7, %6 : vector<1x32xf32>
    %9 = vector.broadcast %cst_7 : f32 to vector<1x32xf32>
    %10 = arith.minimumf %9, %8 : vector<1x32xf32>
    %cst_8 = arith.constant 0.166666672 : f32
    %11 = vector.broadcast %cst_8 : f32 to vector<1x32xf32>
    %12 = arith.mulf %10, %11 : vector<1x32xf32>
    %c0_9 = arith.constant 0 : index
    %c0_10 = arith.constant 0 : index
    %13 = vector.load %arg3[%c0_9, %c0_10] : memref<1x32xf32, #tpu.memory_space<vmem>>, vector<1x32xf32>
    tpu.vector_store %arg3[%c0_9, %c0_10], %12 {strides = array<i32>} : memref<1x32xf32, #tpu.memory_space<vmem>>, vector<1x32xf32>,
    return
  }
}

</mosaic_0001>

<llo_original>
// kernel: tpu_custom_call.1
$region0: #{tpu_custom_call.1}
  #allocation0 [shape = 'u32[]', space=smem, size = 0x4, offset = 0x4, fixed_abs, tag = 'smem constant byte address 0x4 - core index']
  #allocation1 [shape = 'u32[144,128]{1,0:T(1,128)}', space=vmem, size = 0x12000, scoped, tag = 'internal scratch']
  %s0 = inlined_call_operand.hbm [shape: f32[1,64], index: 0, kind: input, shape index: {}]
  %s1 = inlined_call_operand.hbm [shape: f32[32,64], index: 1, kind: input, shape index: {}]
  %s2 = inlined_call_operand.vmem [shape: f32[1,32], index: 2, kind: input, shape index: {}]
  %s3 = inlined_call_operand.hbm [shape: f32[1,32], index: 3, kind: output, shape index: {}]
  %s4 = sld [smem:[#allocation0]]
  $region30: #{tpu_custom_call.1} parent=0
    _
  %s6 = ssub.s32 1, %s4
  %s7 = scalar_select 0, %s6, %s4
  $region1: #{tpu_custom_call.1} parent=0
    #allocation2 [shape = 'u8[512]{0}', space=vmem, size = 0x400, scoped, tag = 'input window, operand 0, single buffered']
    #allocation3 [shape = 's32[1]{0}', space=sflag, size = 0x4, scoped, tag = 'scoped memory for tpu_custom_call.1']
    #allocation4 [shape = 's32[1]{0}', space=sflag, size = 0x4, scoped, tag = 'scoped memory for tpu_custom_call.1']
    #allocation5 [shape = 'u8[16384]{0}', space=vmem, size = 0x4000, scoped, tag = 'input window, operand 1, single buffered']
    #allocation6 [shape = 's32[1]{0}', space=sflag, size = 0x4, scoped, tag = 'scoped memory for tpu_custom_call.1']
    #allocation7 [shape = 'u8[512]{0}', space=vmem, size = 0x400, scoped, tag = 'output window, operand 0, single buffered']
    %8 = vsyncpa [#allocation3], 0
    %9 = vsyncpa [#allocation6], 0
    %10 = vsyncpa [#allocation4], 0
    // Predicated region
    $region2: #{tpu_custom_call.1} parent=1 // pred_check
      _
    $region3: #{tpu_custom_call.1} parent=1 // pred_check_branch
      %12 = sbr.rel (0) target = $region5
    $region4: #{tpu_custom_call.1} parent=1 // pred_region
      %s14 = ssub.s32 16, 16
      %15 = vsyncadd [#allocation3], %s14
      %s17 = sshll.u32 [#allocation2], 4
      %s18 = int_to_ptr.vmem [resolvable:$true] %s17
      %20 = dma.hbm_to_vmem [thread:$0]  %s0, 16, %s18, [#allocation3]
    $region5: #{tpu_custom_call.1} parent=1 // pred_fallthru
      _
    // Predicated region
    $region6: #{tpu_custom_call.1} parent=1 // pred_check
      _
    $region7: #{tpu_custom_call.1} parent=1 // pred_check_branch
      %22 = sbr.rel (0) target = $region9
    $region8: #{tpu_custom_call.1} parent=1 // pred_region
      %s24 = ssub.s32 512, 512
      %25 = vsyncadd [#allocation6], %s24
      %s26 = sshll.u32 [#allocation5], 4
      %s27 = int_to_ptr.vmem [resolvable:$true] %s26
      %32 = dma.hbm_to_vmem [thread:$0]  %s1, 512, %s27, [#allocation6], 128, 128, 8
    $region9: #{tpu_custom_call.1} parent=1 // pred_fallthru
      _
    // Predicated region
    $region10: #{tpu_custom_call.1} parent=1 // pred_check
      _
    $region11: #{tpu_custom_call.1} parent=1 // pred_check_branch
      %34 = sbr.rel (0) target = $region13
    $region12: #{tpu_custom_call.1} parent=1 // pred_region
      _
    $region13: #{tpu_custom_call.1} parent=1 // pred_fallthru
      _
    // Predicated region
    $region14: #{tpu_custom_call.1} parent=1 // pred_check
      _
    $region15: #{tpu_custom_call.1} parent=1 // pred_check_branch
      %36 = sbr.rel (0) target = $region17
    $region16: #{tpu_custom_call.1} parent=1 // pred_region
      %37 = dma.done [#allocation3], 16
    $region17: #{tpu_custom_call.1} parent=1 // pred_fallthru
      _
    // Predicated region
    $region18: #{tpu_custom_call.1} parent=1 // pred_check
      _
    $region19: #{tpu_custom_call.1} parent=1 // pred_check_branch
      %39 = sbr.rel (0) target = $region21
    $region20: #{tpu_custom_call.1} parent=1 // pred_region
      %40 = dma.done [#allocation6], 512
    $region21: #{tpu_custom_call.1} parent=1 // pred_fallthru
      _
    %v41 = vld [vmem:[#allocation2] sm:$0x1]
    %v42 = vld [vmem:[#allocation5] sm:$0xff]
    %v43 = vld [vmem:[#allocation5 + $0x8] sm:$0xff]
    %v44 = vld [vmem:[#allocation5 + $0x10] sm:$0xff]
    %v45 = vld [vmem:[#allocation5 + $0x18] sm:$0xff]
    %v46 = vld [vmem:[%s2] sm:$0x1]
    %vm47 = vcmask 523264
    %v49 = vsel %vm47, %v41, 0
    %v52 = vsel %vm47, %v42, 0
    %v55 = vsel %vm47, %v43, 0
    %v58 = vsel %vm47, %v44, 0
    %v61 = vsel %vm47, %v45, 0
    %63 = vmatprep.subr.mxu0 0.0
    %64 = vmatpush1.xpose.msra.mxu0 0.0
    %65 = vmatprep.subr.mxu0 0.0
    %66 = vmatpush1.xpose.msra.mxu0 0.0
    %67 = vmatprep.subr.mxu0 0.0
    %68 = vmatpush1.xpose.msra.mxu0 0.0
    %69 = vmatprep.subr.mxu0 0.0
    %70 = vmatpush1.xpose.msra.mxu0 0.0
    %71 = vmatprep.subr.mxu0 0.0
    %72 = vmatpush1.xpose.msra.mxu0 0.0
    %73 = vmatprep.subr.mxu0 0.0
    %74 = vmatpush1.xpose.msra.mxu0 0.0
    %75 = vmatprep.subr.mxu0 0.0
    %76 = vmatpush1.xpose.msra.mxu0 0.0
    %77 = vmatprep.subr.mxu0 0.0
    %78 = vmatpush1.xpose.msra.mxu0 0.0
    %79 = vmatprep.subr.mxu0 0.0
    %80 = vmatpush1.xpose.msra.mxu0 0.0
    %81 = vmatprep.subr.mxu0 0.0
    %82 = vmatpush1.xpose.msra.mxu0 0.0
    %83 = vmatprep.subr.mxu0 0.0
    %84 = vmatpush1.xpose.msra.mxu0 0.0
    %85 = vmatprep.subr.mxu0 0.0
    %86 = vmatpush1.xpose.msra.mxu0 0.0
    %87 = vmatprep.subr.mxu0 0.0
    %88 = vmatpush1.xpose.msra.mxu0 %v61
    %89 = vmatprep.subr.mxu0 0.0
    %90 = vmatpush1.xpose.msra.mxu0 %v58
    %91 = vmatprep.subr.mxu0 0.0
    %92 = vmatpush1.xpose.msra.mxu0 %v55
    %93 = vmatprep.subr.mxu0 0.0
    %94 = vmatpush1.xpose.msra.mxu0 %v52
    %95 = vmatprep.subr.mxu0 0.0
    %96 = vmatpush2.xpose.msra.mxu0 0.0
    %97 = vmatprep.subr.mxu0 0.0
    %98 = vmatpush2.xpose.msra.mxu0 0.0
    %99 = vmatprep.subr.mxu0 0.0
    %100 = vmatpush2.xpose.msra.mxu0 0.0
    %101 = vmatprep.subr.mxu0 0.0
    %102 = vmatpush2.xpose.msra.mxu0 0.0
    %103 = vmatprep.subr.mxu0 0.0
    %104 = vmatpush2.xpose.msra.mxu0 0.0
    %105 = vmatprep.subr.mxu0 0.0
    %106 = vmatpush2.xpose.msra.mxu0 0.0
    %107 = vmatprep.subr.mxu0 0.0
    %108 = vmatpush2.xpose.msra.mxu0 0.0
    %109 = vmatprep.subr.mxu0 0.0
    %110 = vmatpush2.xpose.msra.mxu0 0.0
    %111 = vmatprep.subr.mxu0 0.0
    %112 = vmatpush2.xpose.msra.mxu0 0.0
    %113 = vmatprep.subr.mxu0 0.0
    %114 = vmatpush2.xpose.msra.mxu0 0.0
    %115 = vmatprep.subr.mxu0 0.0
    %116 = vmatpush2.xpose.msra.mxu0 0.0
    %117 = vmatprep.subr.mxu0 0.0
    %118 = vmatpush2.xpose.msra.mxu0 0.0
    %119 = vmatprep.subr.mxu0 0.0
    %120 = vmatpush2.xpose.msra.mxu0 0.0
    %121 = vmatprep.subr.mxu0 0.0
    %122 = vmatpush2.xpose.msra.mxu0 0.0
    %123 = vmatprep.subr.mxu0 0.0
    %124 = vmatpush2.xpose.msra.mxu0 0.0
    %125 = vmatprep.subr.mxu0 0.0
    %126 = vmatpush2.xpose.msra.mxu0 0.0
    %127 = vmatprep.mubr.f32.mxu0 0.0
    %128 = vmatmul.mubr.f32.gmra.mxu0 %v49
    %v129 = vpop.f32.mrf.mxu0
    %v130 = vadd.f32 %v46, %v129
    %v131 = vpop.f32.mrf.mxu0
    %132 = vdwg.mxu0
    %v133 = vadd.f32 %v130, 3.0
    %v134 = vmax.f32 %v133, 0.0
    %v135 = vmin.f32 %v134, 6.0
    %v136 = vmul.f32 %v135, 0.16666667
    %vm137 = vcmask 253952
    %138 = vst.msk [vmem:[#allocation7] sm:$0x1] %vm137, %v136
    // Predicated region
    $region22: #{tpu_custom_call.1} parent=1 // pred_check
      _
    $region23: #{tpu_custom_call.1} parent=1 // pred_check_branch
      %140 = sbr.rel (0) target = $region25
    $region24: #{tpu_custom_call.1} parent=1 // pred_region
      %s142 = ssub.s32 16, 16
      %143 = vsyncadd [#allocation4], %s142
      %s145 = sshll.u32 [#allocation7], 4
      %s146 = int_to_ptr.vmem [resolvable:$true] %s145
      %148 = dma.vmem_to_hbm [thread:$0]  %s146, 16, %s3, [#allocation4]
    $region25: #{tpu_custom_call.1} parent=1 // pred_fallthru
      _
    // Predicated region
    $region26: #{tpu_custom_call.1} parent=1 // pred_check
      _
    $region27: #{tpu_custom_call.1} parent=1 // pred_check_branch
      %150 = sbr.rel (0) target = $region29
    $region28: #{tpu_custom_call.1} parent=1 // pred_region
      %151 = dma.done [#allocation4], 16
    $region29: #{tpu_custom_call.1} parent=1 // pred_fallthru
      _
    %152 = vsyncpa [#allocation3], 1
    %153 = vsyncpa [#allocation6], 1
    %154 = vsyncpa [#allocation4], 1

</llo_original>
